<compile_context>
chip_gen: v7x
topology: tpu7x:2x2x1
jax: 0.10.0
libtpu: 0.0.40
codegen_flags: <defaults>
</compile_context>

<pallas_src>
import functools
import math

import jax
import jax.numpy as jnp
from jax.experimental import pallas as pl
from jax.experimental.pallas import tpu as pltpu


def _round_up(v, m):
    return (v + m - 1) // m * m


def _vmem_bytes(tm, n, x_itemsize, out_itemsize, cd_itemsize):
    """Conservative per-step VMEM footprint estimate (double-buffered operands)."""
    w = 2 * n * n * cd_itemsize          # resident weight (double-buffered)
    x_t = 2 * tm * n * x_itemsize        # streaming x tiles
    out_t = 2 * tm * n * out_itemsize    # streaming output tiles
    const = 2 * 2 * n * 4                # bias/u_context stack
    acc = 2 * tm * n * 4                 # f32 matmul result + epilogue temps
    return w + x_t + out_t + const + acc


def _choose_tm(rows, n, tm, x_itemsize, out_itemsize, cd_itemsize, budget):
    if rows <= 256:
        # Single block covering all rows, rounded to a full 16-sublane tile.
        return _round_up(max(rows, 16), 16)
    tm_eff = max(128, _round_up(min(tm, rows), 128))
    # Shrink until the footprint fits the (v7x-safe) VMEM budget.
    while tm_eff > 128 and _vmem_bytes(tm_eff, n, x_itemsize, out_itemsize,
                                       cd_itemsize) > budget:
        tm_eff //= 2
    # Guarantee >= 2 grid steps so the "parallel" row axis can shard across
    # both v7x TensorCores (costs only ~0.35us/step on single-TC v5e/v6e).
    if pl.cdiv(rows, tm_eff) < 2:
        tm_eff = _round_up(pl.cdiv(rows, 2), 16)
    return tm_eff


def _attention_kernel(x_ref, w_ref, c_ref, o_ref, *, compute_dtype):
    # x_ref: (TM, N) input dtype; w_ref: (N, N) compute dtype, ALREADY W^T
    # (in, out) layout; c_ref: (2, N) f32 with row 0 = bias, row 1 = u_context.
    x = x_ref[...].astype(compute_dtype)         # VPU cast, already in VMEM
    h = jnp.dot(x, w_ref[...],                   # MXU, f32 accumulate
                preferred_element_type=jnp.float32)
    b = c_ref[0:1, :]                            # (1, N) f32, broadcasts
    u = c_ref[1:2, :]                            # (1, N) f32
    h = jnp.tanh(h + b) * u                      # VPU add -> EUP tanh -> VPU mul
    o_ref[...] = h.astype(o_ref.dtype)


def attention_layer_forward(x, weight, bias, u_context, *,
                            compute_dtype=jnp.bfloat16, tm=512,
                            vmem_budget_bytes=48 * 1024 * 1024):
    """Pallas implementation of AttentionLayer.forward.

    x        : (..., num_hid)
    weight   : (num_hid, num_hid)  PyTorch nn.Linear weight, (out, in) layout
    bias     : (num_hid,)
    u_context: (num_hid,)
    Returns (sm, 0) exactly like the PyTorch module. Pass
    compute_dtype=jnp.float32 for bit-closer (slower) numerics.
    """
    num_hid = x.shape[-1]
    lead_shape = x.shape[:-1]
    rows = math.prod(lead_shape) if lead_shape else 1
    out_dtype = x.dtype

    x_itemsize = jnp.dtype(x.dtype).itemsize
    out_itemsize = jnp.dtype(out_dtype).itemsize
    cd_itemsize = jnp.dtype(compute_dtype).itemsize

    # Metadata-only reshape; x stays in its original dtype (cast in-kernel).
    x2d = x.reshape(rows, num_hid)
    # One-time transpose + cast of the weight (single fused XLA pass over N^2),
    # so the kernel contracts in the canonical MXU orientation.
    w_t = weight.T.astype(compute_dtype)                        # (in, out)
    # bias + u_context stacked into one VMEM-resident constant (f32 epilogue).
    const = jnp.stack([bias.astype(jnp.float32),
                       u_context.astype(jnp.float32)])          # (2, num_hid)

    tm_eff = _choose_tm(rows, num_hid, tm, x_itemsize, out_itemsize,
                        cd_itemsize, vmem_budget_bytes)
    grid = (pl.cdiv(rows, tm_eff),)

    footprint = _vmem_bytes(tm_eff, num_hid, x_itemsize, out_itemsize,
                            cd_itemsize)
    vmem_limit = None
    if footprint > 16 * 1024 * 1024:
        # Raise the scoped-VMEM limit above the per-generation defaults
        # (16 MiB v5e / 32 MiB v6e+v7x). Capped below v5e/v6e's 128 MiB
        # physical; footprints beyond v7x's 64 MiB would need column tiling.
        vmem_limit = int(min(max(footprint * 5 // 4, 32 * 1024 * 1024),
                             100 * 1024 * 1024))

    cost = pl.CostEstimate(
        flops=2 * rows * num_hid * num_hid,
        transcendentals=rows * num_hid,
        bytes_accessed=(rows * num_hid * x_itemsize          # x (read once)
                        + num_hid * num_hid * cd_itemsize    # weight
                        + 2 * num_hid * 4                    # bias + u_context
                        + rows * num_hid * out_itemsize),    # output
    )

    out2d = pl.pallas_call(
        functools.partial(_attention_kernel, compute_dtype=compute_dtype),
        out_shape=jax.ShapeDtypeStruct((rows, num_hid), out_dtype),
        grid=grid,
        in_specs=[
            pl.BlockSpec((tm_eff, num_hid), lambda i: (i, 0)),   # x tile / step
            pl.BlockSpec((num_hid, num_hid), lambda i: (0, 0)),  # W^T, resident
            pl.BlockSpec((2, num_hid), lambda i: (0, 0)),        # bias/u, resident
        ],
        out_specs=pl.BlockSpec((tm_eff, num_hid), lambda i: (i, 0)),
        compiler_params=pltpu.CompilerParams(
            dimension_semantics=("parallel",),    # megacore sharding on v7x
            vmem_limit_bytes=vmem_limit,
        ),
        cost_estimate=cost,
    )(x2d, w_t, const)

    sm = out2d.reshape(*lead_shape, num_hid)
    return sm, 0


def reference_forward(x, weight, bias, u_context):
    h = jnp.tanh(jnp.einsum("...i,oi->...o", x, weight) + bias)
    return h * u_context


if __name__ == "__main__":
    num_hid = 32
    batch, seq = 2, 8

    key = jax.random.PRNGKey(0)
    kx, kw, kb, ku = jax.random.split(key, 4)

    # Deterministic parameter init (shapes per nn.Linear(num_hid, num_hid)).
    bound = 1.0 / jnp.sqrt(num_hid)
    weight = jax.random.uniform(kw, (num_hid, num_hid), jnp.float32, -bound, bound)
    bias = jax.random.uniform(kb, (num_hid,), jnp.float32, -bound, bound)
    # u_context ~ N(0, 0.01) in the reference; made deterministic here.
    u_context = 0.01 * jax.random.normal(ku, (num_hid,), jnp.float32)

    x = jax.random.normal(kx, (batch, seq, num_hid), jnp.float32)

    sm, zero = attention_layer_forward(x, weight, bias, u_context)
    sm = jax.block_until_ready(sm)

    ref = reference_forward(x, weight, bias, u_context)
    assert sm.shape == (batch, seq, num_hid)
    assert sm.dtype == x.dtype
    assert zero == 0
    # bf16 weight / in-kernel bf16 cast of x with f32 accumulation: tolerance
    # reflects bf16 rounding of the matmul operands.
    assert jnp.allclose(sm, ref, atol=2e-3, rtol=5e-2), float(
        jnp.max(jnp.abs(sm - ref)))

    print("KERNEL_OK")
</pallas_src>

<mosaic_0001>
module attributes {stable_mosaic.version = 11 : i64} {
  func.func @_attention_kernel(%arg0: i32, %arg1: memref<16x32xf32, #tpu.memory_space<vmem>>, %arg2: memref<32x32xbf16, #tpu.memory_space<vmem>>, %arg3: memref<2x32xf32, #tpu.memory_space<vmem>>, %arg4: memref<16x32xf32, #tpu.memory_space<vmem>>) attributes {dimension_semantics = [#tpu.dimension_semantics<parallel>], iteration_bounds = array<i64: 1>, scalar_prefetch = 0 : i64, scratch_operands = 0 : i64, tpu.core_type = #tpu.core_type<tc>, window_params = [{transform_indices = @transform_0, window_bounds = array<i64: 16, 32>}, {pipeline_mode = #tpu.pipeline_mode<synchronous>, transform_indices = @transform_1, window_bounds = array<i64: 32, 32>}, {pipeline_mode = #tpu.pipeline_mode<synchronous>, transform_indices = @transform_2, window_bounds = array<i64: 2, 32>}, {transform_indices = @transform_3, window_bounds = array<i64: 16, 32>}]} {
    %c0 = arith.constant 0 : index
    %c0_0 = arith.constant 0 : index
    %0 = vector.load %arg1[%c0, %c0_0] : memref<16x32xf32, #tpu.memory_space<vmem>>, vector<16x32xf32>
    %1 = arith.truncf %0 : vector<16x32xf32> to vector<16x32xbf16>
    %c0_1 = arith.constant 0 : index
    %c0_2 = arith.constant 0 : index
    %2 = vector.load %arg2[%c0_1, %c0_2] : memref<32x32xbf16, #tpu.memory_space<vmem>>, vector<32x32xbf16>
    %cst = arith.constant dense<0.000000e+00> : vector<16x32xf32>
    %3 = tpu.matmul %1, %2, %cst {dimension_numbers = #tpu.dot_dimension_numbers<[1], [0], [0], [1], [0, 0, 1, 1], [], []>} : vector<16x32xbf16>, vector<32x32xbf16>, vector<16x32xf32> -> vector<16x32xf32>
    %c0_3 = arith.constant 0 : index
    %c0_4 = arith.constant 0 : index
    %4 = vector.load %arg3[%c0_3, %c0_4] : memref<2x32xf32, #tpu.memory_space<vmem>>, vector<1x32xf32>
    %c1 = arith.constant 1 : index
    %c0_5 = arith.constant 0 : index
    %5 = vector.load %arg3[%c1, %c0_5] : memref<2x32xf32, #tpu.memory_space<vmem>>, vector<1x32xf32>
    %6 = vector.broadcast %4 : vector<1x32xf32> to vector<16x32xf32>
    %7 = arith.addf %3, %6 : vector<16x32xf32>
    %8 = math.tanh %7 : vector<16x32xf32>
    %9 = vector.broadcast %5 : vector<1x32xf32> to vector<16x32xf32>
    %10 = arith.mulf %8, %9 : vector<16x32xf32>
    %c0_6 = arith.constant 0 : index
    %c0_7 = arith.constant 0 : index
    %11 = vector.load %arg4[%c0_6, %c0_7] : memref<16x32xf32, #tpu.memory_space<vmem>>, vector<16x32xf32>
    tpu.vector_store %arg4[%c0_6, %c0_7], %10 {strides = array<i32>} : memref<16x32xf32, #tpu.memory_space<vmem>>, vector<16x32xf32>,
    return
  }
  func.func @transform_0(%arg0: i32) -> (i32, i32) {
    %c0_i32 = arith.constant 0 : i32
    %c0_i32_0 = arith.constant 0 : i32
    return %arg0, %c0_i32 : i32, i32
  }
  func.func @transform_1(%arg0: i32) -> (i32, i32) {
    %c0_i32 = arith.constant 0 : i32
    %c0_i32_0 = arith.constant 0 : i32
    %c0_i32_1 = arith.constant 0 : i32
    return %c0_i32, %c0_i32_0 : i32, i32
  }
  func.func @transform_2(%arg0: i32) -> (i32, i32) {
    %c0_i32 = arith.constant 0 : i32
    %c0_i32_0 = arith.constant 0 : i32
    %c0_i32_1 = arith.constant 0 : i32
    return %c0_i32, %c0_i32_0 : i32, i32
  }
  func.func @transform_3(%arg0: i32) -> (i32, i32) {
    %c0_i32 = arith.constant 0 : i32
    %c0_i32_0 = arith.constant 0 : i32
    return %arg0, %c0_i32 : i32, i32
  }
}

</mosaic_0001>

<llo_original>
// kernel: tpu_custom_call.1
$region0: #{tpu_custom_call.1}
  #allocation0 [shape = 'u32[]', space=smem, size = 0x4, offset = 0x4, fixed_abs, tag = 'smem constant byte address 0x4 - core index']
  #allocation1 [shape = 'u32[144,128]{1,0:T(1,128)}', space=vmem, size = 0x12000, scoped, tag = 'internal scratch']
  %s0 = inlined_call_operand.hbm [shape: f32[16,32], index: 0, kind: input, shape index: {}]
  %s1 = inlined_call_operand.hbm [shape: bf16[32,32], index: 1, kind: input, shape index: {}]
  %s2 = inlined_call_operand.vmem [shape: f32[2,32], index: 2, kind: input, shape index: {}]
  %s3 = inlined_call_operand.hbm [shape: f32[16,32], index: 3, kind: output, shape index: {}]
  %s4 = sld [smem:[#allocation0]]
  $region30: #{tpu_custom_call.1} parent=0
    _
  %s6 = ssub.s32 1, %s4
  %s7 = scalar_select 0, %s6, %s4
  $region1: #{tpu_custom_call.1} parent=0
    #allocation2 [shape = 'u8[8192]{0}', space=vmem, size = 0x2000, scoped, tag = 'input window, operand 0, single buffered']
    #allocation3 [shape = 's32[1]{0}', space=sflag, size = 0x4, scoped, tag = 'scoped memory for tpu_custom_call.1']
    #allocation4 [shape = 's32[1]{0}', space=sflag, size = 0x4, scoped, tag = 'scoped memory for tpu_custom_call.1']
    #allocation5 [shape = 'u8[8192]{0}', space=vmem, size = 0x2000, scoped, tag = 'input window, operand 1, single buffered']
    #allocation6 [shape = 's32[1]{0}', space=sflag, size = 0x4, scoped, tag = 'scoped memory for tpu_custom_call.1']
    #allocation7 [shape = 'u8[8192]{0}', space=vmem, size = 0x2000, scoped, tag = 'output window, operand 0, single buffered']
    %8 = vsyncpa [#allocation3], 0
    %9 = vsyncpa [#allocation6], 0
    %10 = vsyncpa [#allocation4], 0
    // Predicated region
    $region2: #{tpu_custom_call.1} parent=1 // pred_check
      _
    $region3: #{tpu_custom_call.1} parent=1 // pred_check_branch
      %12 = sbr.rel (0) target = $region5
    $region4: #{tpu_custom_call.1} parent=1 // pred_region
      %s14 = ssub.s32 256, 256
      %15 = vsyncadd [#allocation3], %s14
      %s16 = sshll.u32 [#allocation2], 4
      %s17 = int_to_ptr.vmem [resolvable:$true] %s16
      %22 = dma.hbm_to_vmem [thread:$0]  %s0, 256, %s17, [#allocation3], 128, 128, 8
    $region5: #{tpu_custom_call.1} parent=1 // pred_fallthru
      _
    // Predicated region
    $region6: #{tpu_custom_call.1} parent=1 // pred_check
      _
    $region7: #{tpu_custom_call.1} parent=1 // pred_check_branch
      %24 = sbr.rel (0) target = $region9
    $region8: #{tpu_custom_call.1} parent=1 // pred_region
      %s26 = ssub.s32 256, 256
      %27 = vsyncadd [#allocation6], %s26
      %s28 = sshll.u32 [#allocation5], 4
      %s29 = int_to_ptr.vmem [resolvable:$true] %s28
      %34 = dma.hbm_to_vmem [thread:$0]  %s1, 256, %s29, [#allocation6], 64, 64, 4
    $region9: #{tpu_custom_call.1} parent=1 // pred_fallthru
      _
    // Predicated region
    $region10: #{tpu_custom_call.1} parent=1 // pred_check
      _
    $region11: #{tpu_custom_call.1} parent=1 // pred_check_branch
      %36 = sbr.rel (0) target = $region13
    $region12: #{tpu_custom_call.1} parent=1 // pred_region
      _
    $region13: #{tpu_custom_call.1} parent=1 // pred_fallthru
      _
    // Predicated region
    $region14: #{tpu_custom_call.1} parent=1 // pred_check
      _
    $region15: #{tpu_custom_call.1} parent=1 // pred_check_branch
      %38 = sbr.rel (0) target = $region17
    $region16: #{tpu_custom_call.1} parent=1 // pred_region
      %39 = dma.done [#allocation3], 256
    $region17: #{tpu_custom_call.1} parent=1 // pred_fallthru
      _
    // Predicated region
    $region18: #{tpu_custom_call.1} parent=1 // pred_check
      _
    $region19: #{tpu_custom_call.1} parent=1 // pred_check_branch
      %41 = sbr.rel (0) target = $region21
    $region20: #{tpu_custom_call.1} parent=1 // pred_region
      %42 = dma.done [#allocation6], 256
    $region21: #{tpu_custom_call.1} parent=1 // pred_fallthru
      _
    %v44 = vld [vmem:[#allocation2] sm:$0xff]
    %v45 = vld [vmem:[#allocation2 + $0x8] sm:$0xff]
    %v46 = vpack.c.bf16 %v45, %v44
    %v47 = vld [vmem:[#allocation5] sm:$0xf]
    %v48 = vld [vmem:[#allocation5 + $0x4] sm:$0xf]
    %v49 = vld [vmem:[#allocation5 + $0x8] sm:$0xf]
    %v50 = vld [vmem:[#allocation5 + $0xc] sm:$0xf]
    %v51 = vld [vmem:[%s2] sm:$0x1]
    %v52 = vld [vmem:[%s2 + $0x1] sm:$0x1]
    %v53 = vlaneseq
    %v54 = vshrl.u32 %v53, 7
    %v55 = vsub.s32 0, %v54
    %v56 = vrot.slane %v51, %v55
    %v61 = vunpack.c.l.b16 %v47
    %v62 = vunpack.c.l.b16 %v48
    %v63 = vunpack.c.l.b16 %v49
    %v64 = vunpack.c.l.b16 %v50
    %v65 = vpack.c.b16 %v62, %v61
    %v66 = vpack.c.b16 %v64, %v63
    %vm69 = vcmask 261120
    %v71 = vsel %vm69, %v46, 0
    %73 = vmatprep.subr.bf16.mxu0 0
    %74 = vmatpush1.bf16.msra.mxu0 %v65
    %75 = vmatprep.subr.bf16.mxu0 0
    %76 = vmatpush1.bf16.msra.mxu0 %v66
    %77 = vmatprep.subr.bf16.mxu0 0
    %78 = vmatpush1.bf16.msra.mxu0 0
    %79 = vmatprep.subr.bf16.mxu0 0
    %80 = vmatpush1.bf16.msra.mxu0 0
    %81 = vmatprep.subr.bf16.mxu0 0
    %82 = vmatpush1.bf16.msra.mxu0 0
    %83 = vmatprep.subr.bf16.mxu0 0
    %84 = vmatpush1.bf16.msra.mxu0 0
    %85 = vmatprep.subr.bf16.mxu0 0
    %86 = vmatpush1.bf16.msra.mxu0 0
    %87 = vmatprep.subr.bf16.mxu0 0
    %88 = vmatpush1.bf16.msra.mxu0 0
    %89 = vmatprep.subr.bf16.mxu0 0
    %90 = vmatpush1.bf16.msra.mxu0 0
    %91 = vmatprep.subr.bf16.mxu0 0
    %92 = vmatpush1.bf16.msra.mxu0 0
    %93 = vmatprep.subr.bf16.mxu0 0
    %94 = vmatpush1.bf16.msra.mxu0 0
    %95 = vmatprep.subr.bf16.mxu0 0
    %96 = vmatpush1.bf16.msra.mxu0 0
    %97 = vmatprep.subr.bf16.mxu0 0
    %98 = vmatpush1.bf16.msra.mxu0 0
    %99 = vmatprep.subr.bf16.mxu0 0
    %100 = vmatpush1.bf16.msra.mxu0 0
    %101 = vmatprep.subr.bf16.mxu0 0
    %102 = vmatpush1.bf16.msra.mxu0 0
    %103 = vmatprep.subr.bf16.mxu0 0
    %104 = vmatpush1.bf16.msra.mxu0 0
    %105 = vmatprep.mubr.bf16.mxu0 0
    %106 = vmatmul.mubr.bf16.gmra.mrb[0].mxu0 %v71
    %v107 = vpop.f32.mrb[0].mxu0
    %v108 = vadd.f32 %v56, %v107
    %v109 = vpop.f32.mrb[0].mxu0
    %v110 = vpop.f32.mrb[0].mxu0
    %v111 = vadd.f32 %v56, %v110
    %v112 = vpop.f32.mrb[0].mxu0
    %113 = vdwg.mxu0
    %v114 = vtanh.pop %v108
    %v115 = vtanh.pop %v111
    %v116 = vlaneseq
    %v117 = vshrl.u32 %v116, 7
    %v118 = vsub.s32 0, %v117
    %v119 = vrot.slane %v52, %v118
    %v120 = vmul.f32 %v114, %v119
    %v121 = vmul.f32 %v115, %v119
    %122 = vst.msk [vmem:[#allocation7] sm:$0xff] %vm69, %v120
    %123 = vst.msk [vmem:[#allocation7 + $0x8] sm:$0xff] %vm69, %v121
    // Predicated region
    $region22: #{tpu_custom_call.1} parent=1 // pred_check
      _
    $region23: #{tpu_custom_call.1} parent=1 // pred_check_branch
      %125 = sbr.rel (0) target = $region25
    $region24: #{tpu_custom_call.1} parent=1 // pred_region
      %s127 = ssub.s32 256, 256
      %128 = vsyncadd [#allocation4], %s127
      %s129 = sshll.u32 [#allocation7], 4
      %s130 = int_to_ptr.vmem [resolvable:$true] %s129
      %135 = dma.vmem_to_hbm [thread:$0]  %s130, 256, %s3, [#allocation4], 128, 128, 8
    $region25: #{tpu_custom_call.1} parent=1 // pred_fallthru
      _
    // Predicated region
    $region26: #{tpu_custom_call.1} parent=1 // pred_check
      _
    $region27: #{tpu_custom_call.1} parent=1 // pred_check_branch
      %137 = sbr.rel (0) target = $region29
    $region28: #{tpu_custom_call.1} parent=1 // pred_region
      %138 = dma.done [#allocation4], 256
    $region29: #{tpu_custom_call.1} parent=1 // pred_fallthru
      _
    %139 = vsyncpa [#allocation3], 1
    %140 = vsyncpa [#allocation6], 1
    %141 = vsyncpa [#allocation4], 1

</llo_original>
